<compile_context>
chip_gen: v7x
topology: tpu7x:2x2x1
jax: 0.10.0
libtpu: 0.0.40
codegen_flags: <defaults>
</compile_context>

<pallas_src>
import functools
import math

import jax
import jax.numpy as jnp
from jax.experimental import pallas as pl
from jax.experimental.pallas import tpu as pltpu


def _round_up(x, m):
    return ((x + m - 1) // m) * m


# -----------------------------------------------------------------------------
# Kernel A: per-(batch, hw-tile) readout for ALL mixture components at once.
#   shared features (1x1 conv + ReLU)                          -> (CF,   T)
#   stacked saliency nets (conv1x1+softplus, conv1x1+softplus) -> (K,    T)
#   stacked scanpath nets (conv1x1 + softplus)                 -> (K*H2, T)
#   fixation selection (1x1 conv over concat channels)         -> (K,    T)
# Layout: channels on sublanes, pixels on lanes (lane-dense loads/stores).
# Matmul operands bf16, accumulation f32.
# -----------------------------------------------------------------------------
def _readout_kernel(xr_ref, scan_ref,
                    wf_ref, bf_ref,
                    w1_ref, b1_ref, w2_ref, b2_ref,
                    ws_ref, bs_ref,
                    wcsal_ref, wcsp_ref, bc_ref,
                    out_ref):
    xr = xr_ref[0]        # (Cin, T) bf16
    scan = scan_ref[0]    # (CS,  T) bf16

    # Shared backbone "features": 1x1 conv + ReLU, computed once (shared by all
    # K components).
    feat = jnp.maximum(
        jnp.dot(wf_ref[...], xr, preferred_element_type=jnp.float32)
        + bf_ref[...],
        0.0)                                                             # (CF, T)

    # All K saliency networks fused into stacked matmuls.
    h = jax.nn.softplus(
        jnp.dot(w1_ref[...], feat.astype(jnp.bfloat16),
                preferred_element_type=jnp.float32)
        + b1_ref[...])                                                   # (K*H1, T)
    sal = jax.nn.softplus(
        jnp.dot(w2_ref[...], h.astype(jnp.bfloat16),                     # block-diag
                preferred_element_type=jnp.float32)
        + b2_ref[...])                                                   # (K, T)

    # All K scanpath networks fused.
    sp = jax.nn.softplus(
        jnp.dot(ws_ref[...], scan, preferred_element_type=jnp.float32)
        + bs_ref[...])                                                   # (K*H2, T)

    # Fixation-selection: 1x1 conv over concat([saliency, scanpath]) channels.
    out_ref[0] = (sal * wcsal_ref[...]
                  + jnp.dot(wcsp_ref[...], sp.astype(jnp.bfloat16),      # block-diag
                            preferred_element_type=jnp.float32)
                  + bc_ref[...])                                         # (K, T)


# -----------------------------------------------------------------------------
# Kernel B: finalizer + mixture combination (per batch element).
#   per component: nearest-upsample the low-res readout (via 0/1 expansion
#   matmuls E_h @ lr @ E_w), add cb_weight*centerbias, spatial log_softmax
#   mixture: subtract log(K), stacked per-pixel logsumexp over components
# TODO(synk): the reference Finalizer also applies a learnable Gaussian blur
# and a saliency_map_factor down/up-sample (injected sub-module); omitted here.
# TODO(synk): for very large H*W*K, tile spatially with an online logsumexp
# carry instead of loading the full (1, K, H, W) working set.
# -----------------------------------------------------------------------------
def _finalize_kernel(pred_ref, cb_ref, eh_ref, ew_ref, cbw_ref, out_ref,
                     *, n_components):
    cb = cb_ref[0]                       # (H, W)
    eh = eh_ref[...]                     # (H, rh)  0/1 nearest-expansion matrix
    ew = ew_ref[...]                     # (rw, W)  0/1 nearest-expansion matrix
    logk = math.log(n_components)

    lks = []
    for k in range(n_components):        # static, small K -> unrolled
        lr = pred_ref[0, k]               # (rh, rw) low-res readout
        up = jnp.dot(eh,
                     jnp.dot(lr, ew, preferred_element_type=jnp.float32),
                     preferred_element_type=jnp.float32)        # (H, W) nearest
        sk = up + cbw_ref[k] * cb         # cbw from SMEM (scalar path)
        m = jnp.max(sk)
        lse = m + jnp.log(jnp.sum(jnp.exp(sk - m)))
        lks.append(sk - lse - logk)       # per-component log density

    # Stacked per-pixel logsumexp over components (one max, K exps, one log).
    mx = lks[0]
    for k in range(1, n_components):
        mx = jnp.maximum(mx, lks[k])
    s = jnp.exp(lks[0] - mx)
    for k in range(1, n_components):
        s = s + jnp.exp(lks[k] - mx)
    out_ref[0, 0] = mx + jnp.log(s)


# -----------------------------------------------------------------------------
# Pure-JAX glue (resizes / scanpath-feature encoding / parameter setup)
# -----------------------------------------------------------------------------
def nearest_indices(out_n, in_n):
    """PyTorch F.interpolate(mode='nearest') source indices."""
    return (jnp.arange(out_n) * in_n) // out_n


def nearest_resize_nchw(x, out_h, out_w):
    """PyTorch F.interpolate(mode='nearest') equivalent on (..., H, W)."""
    idx_h = nearest_indices(out_h, x.shape[-2])
    idx_w = nearest_indices(out_w, x.shape[-1])
    return x[..., idx_h[:, None], idx_w[None, :]]


def nearest_expand_matrices(out_h, out_w, in_h, in_w):
    """0/1 matrices E_h (out_h, in_h), E_w (in_w, out_w): E_h @ lr @ E_w is a
    nearest upsample with exact PyTorch index semantics."""
    idx_h = nearest_indices(out_h, in_h)
    idx_w = nearest_indices(out_w, in_w)
    e_h = (idx_h[:, None] == jnp.arange(in_h)[None, :]).astype(jnp.float32)
    e_w = (jnp.arange(in_w)[:, None] == idx_w[None, :]).astype(jnp.float32)
    return e_h, e_w


def encode_scanpath_features_at(x_hist, y_hist, xs_coords, ys_coords):
    """Scanpath features evaluated directly at the given pixel coordinates.

    Identical to encoding at full resolution and nearest-resampling, because
    the features are pointwise functions of the pixel coordinate grid."""
    YS, XS = jnp.meshgrid(ys_coords, xs_coords, indexing="ij")   # (rh, rw)
    XS = XS[None, None] - x_hist[:, :, None, None]
    YS = YS[None, None] - y_hist[:, :, None, None]
    dist = jnp.sqrt(XS ** 2 + YS ** 2)
    return jnp.concatenate([XS, YS, dist], axis=1)               # (B, 3*nfix, rh, rw)


def init_params(key, *, n_components, in_channels, n_features,
                sal_hidden, scan_channels, scan_hidden):
    K, CF, H1, CS, H2 = n_components, n_features, sal_hidden, scan_channels, scan_hidden
    ks = jax.random.split(key, 8)
    s = 0.2
    w2 = s * jax.random.normal(ks[4], (K, H1), jnp.float32)
    wcsp = s * jax.random.normal(ks[6], (K, H2), jnp.float32)

    def block_diag(rows, h):
        m = jnp.zeros((K, K * h), jnp.float32)
        for k in range(K):
            m = m.at[k, k * h:(k + 1) * h].set(rows[k])
        return m

    return dict(
        # channels-on-rows layout: y = W @ x
        wf=s * jax.random.normal(ks[0], (CF, in_channels), jnp.float32),
        bf=s * jax.random.normal(ks[1], (CF, 1), jnp.float32),
        # saliency networks stacked across components
        w1s=s * jax.random.normal(ks[2], (K * H1, CF), jnp.float32),
        b1s=s * jax.random.normal(ks[3], (K * H1, 1), jnp.float32),
        w2bd=block_diag(w2, H1),                     # (K, K*H1) block-diagonal
        b2s=jnp.zeros((K, 1), jnp.float32),
        # scanpath networks stacked across components
        wss=0.02 * jax.random.normal(ks[5], (K * H2, CS), jnp.float32),
        bss=jnp.zeros((K * H2, 1), jnp.float32),
        # fixation-selection networks
        wcsal=jnp.ones((K, 1), jnp.float32),
        wcspbd=block_diag(wcsp, H2),                 # (K, K*H2) block-diagonal
        bc=jnp.zeros((K, 1), jnp.float32),
        # finalizer
        cb_weight=jnp.ones((K,), jnp.float32),
    )


def deepgaze_forward(params, x, centerbias, x_hist, y_hist,
                     *, downsample=2, readout_factor=2):
    B, Cin, H, W = x.shape
    K = params["w2bd"].shape[0]
    CF = params["wf"].shape[0]
    KH1 = params["w1s"].shape[0]
    KH2 = params["wss"].shape[0]

    # 1) x = F.interpolate(x, scale_factor=1/downsample)   (nearest)
    x_ds = nearest_resize_nchw(x, H // downsample, W // downsample)

    # 2) readout shape
    rh = math.ceil(H / downsample / readout_factor)
    rw = math.ceil(W / downsample / readout_factor)
    hw = rh * rw

    # 3) features are pointwise (1x1 conv + ReLU) -> commute with the nearest
    #    resample to readout_shape; the conv itself runs inside the kernel.
    x_r = nearest_resize_nchw(x_ds, rh, rw)                       # (B, Cin, rh, rw)

    # 4) scanpath features: built directly at readout resolution on the
    #    nearest-selected full-res coordinate grid (identical to full-res +
    #    nearest resample, without materializing the (B, 3*nfix, H, W) tensor).
    xs_coords = nearest_indices(rw, W).astype(jnp.float32)
    ys_coords = nearest_indices(rh, H).astype(jnp.float32)
    sp_r = encode_scanpath_features_at(x_hist, y_hist, xs_coords, ys_coords)
    CS = sp_r.shape[1]

    # channels-on-sublanes / pixels-on-lanes layout (no transpose needed: NCHW),
    # bf16 activations (halves DMA, native MXU dtype; accumulation stays f32).
    xr_flat = x_r.reshape(B, Cin, hw).astype(jnp.bfloat16)
    sp_flat = sp_r.reshape(B, CS, hw).astype(jnp.bfloat16)

    # hw tiling: lane-multiple tile sized so a double-buffered (Cmax, hw_tile)
    # activation buffer stays ~<=2 MiB (comfortably inside v7x's 64 MiB).
    c_max = max(Cin, CS)
    max_tile = max(128, (2 * 1024 * 1024 // (4 * c_max) // 128) * 128)
    hw_tile = min(max_tile, _round_up(hw, 128))
    hw_pad = _round_up(hw, hw_tile)
    if hw_pad != hw:
        pad = ((0, 0), (0, 0), (0, hw_pad - hw))
        xr_flat = jnp.pad(xr_flat, pad)
        sp_flat = jnp.pad(sp_flat, pad)
    n_hw = hw_pad // hw_tile

    bf16 = lambda a: a.astype(jnp.bfloat16)

    # --- Pallas kernel A: readout maps for all components, lane-dense output ---
    readout = pl.pallas_call(
        _readout_kernel,
        out_shape=jax.ShapeDtypeStruct((B, K, hw_pad), jnp.float32),
        grid=(B, n_hw),
        in_specs=[
            pl.BlockSpec((1, Cin, hw_tile), lambda b, t: (b, 0, t)),
            pl.BlockSpec((1, CS, hw_tile), lambda b, t: (b, 0, t)),
            pl.BlockSpec((CF, Cin), lambda b, t: (0, 0)),
            pl.BlockSpec((CF, 1), lambda b, t: (0, 0)),
            pl.BlockSpec((KH1, CF), lambda b, t: (0, 0)),
            pl.BlockSpec((KH1, 1), lambda b, t: (0, 0)),
            pl.BlockSpec((K, KH1), lambda b, t: (0, 0)),
            pl.BlockSpec((K, 1), lambda b, t: (0, 0)),
            pl.BlockSpec((KH2, CS), lambda b, t: (0, 0)),
            pl.BlockSpec((KH2, 1), lambda b, t: (0, 0)),
            pl.BlockSpec((K, 1), lambda b, t: (0, 0)),
            pl.BlockSpec((K, KH2), lambda b, t: (0, 0)),
            pl.BlockSpec((K, 1), lambda b, t: (0, 0)),
        ],
        out_specs=pl.BlockSpec((1, K, hw_tile), lambda b, t: (b, 0, t)),
        compiler_params=pltpu.CompilerParams(
            dimension_semantics=("parallel", "parallel"),
            vmem_limit_bytes=48 * 1024 * 1024),
    )(xr_flat, sp_flat,
      bf16(params["wf"]), params["bf"],
      bf16(params["w1s"]), params["b1s"], bf16(params["w2bd"]), params["b2s"],
      bf16(params["wss"]), params["bss"],
      params["wcsal"], bf16(params["wcspbd"]), params["bc"])

    # low-res readout maps for the finalizer (no full-res HBM round trip)
    readout_lr = readout[:, :, :hw].reshape(B, K, rh, rw)
    e_h, e_w = nearest_expand_matrices(H, W, rh, rw)              # (H,rh), (rw,W)

    # --- Pallas kernel B: in-kernel nearest upsample + finalize + mixture ---
    out = pl.pallas_call(
        functools.partial(_finalize_kernel, n_components=K),
        out_shape=jax.ShapeDtypeStruct((B, 1, H, W), jnp.float32),
        grid=(B,),
        in_specs=[
            pl.BlockSpec((1, K, rh, rw), lambda b: (b, 0, 0, 0)),
            pl.BlockSpec((1, H, W), lambda b: (b, 0, 0)),
            pl.BlockSpec((H, rh), lambda b: (0, 0)),
            pl.BlockSpec((rw, W), lambda b: (0, 0)),
            pl.BlockSpec(memory_space=pltpu.MemorySpace.SMEM),    # cb weights
        ],
        out_specs=pl.BlockSpec((1, 1, H, W), lambda b: (b, 0, 0, 0)),
        compiler_params=pltpu.CompilerParams(
            dimension_semantics=("parallel",)),
    )(readout_lr, centerbias, e_h, e_w, params["cb_weight"])
    return out


if __name__ == "__main__":
    key = jax.random.PRNGKey(0)
    kx, kcb, kxh, kyh, kp = jax.random.split(key, 5)

    B, Cin, H, W = 2, 3, 32, 32
    nfix = 4
    K = 3

    x = jax.random.normal(kx, (B, Cin, H, W), jnp.float32)
    cb_raw = jax.random.normal(kcb, (B, H, W), jnp.float32)
    centerbias = jax.nn.log_softmax(cb_raw.reshape(B, -1), axis=-1).reshape(B, H, W)
    x_hist = jax.random.uniform(kxh, (B, nfix), jnp.float32, 0.0, W - 1.0)
    y_hist = jax.random.uniform(kyh, (B, nfix), jnp.float32, 0.0, H - 1.0)

    params = init_params(kp, n_components=K, in_channels=Cin, n_features=8,
                         sal_hidden=8, scan_channels=3 * nfix, scan_hidden=8)

    out = deepgaze_forward(params, x, centerbias, x_hist, y_hist)
    out = jax.block_until_ready(out)

    assert out.shape == (B, 1, H, W), out.shape
    assert bool(jnp.all(jnp.isfinite(out)))
    # output is a log-density over the spatial dims -> exp sums to ~1 per image
    sums = jnp.sum(jnp.exp(out), axis=(1, 2, 3))
    assert bool(jnp.all(jnp.abs(sums - 1.0) < 1e-3)), sums
    print("KERNEL_OK")
</pallas_src>

<mosaic_0001>
module attributes {stable_mosaic.version = 11 : i64} {
  func.func @_readout_kernel(%arg0: i32, %arg1: i32, %arg2: memref<1x3x128xbf16, #tpu.memory_space<vmem>>, %arg3: memref<1x12x128xbf16, #tpu.memory_space<vmem>>, %arg4: memref<8x3xbf16, #tpu.memory_space<vmem>>, %arg5: memref<8x1xf32, #tpu.memory_space<vmem>>, %arg6: memref<24x8xbf16, #tpu.memory_space<vmem>>, %arg7: memref<24x1xf32, #tpu.memory_space<vmem>>, %arg8: memref<3x24xbf16, #tpu.memory_space<vmem>>, %arg9: memref<3x1xf32, #tpu.memory_space<vmem>>, %arg10: memref<24x12xbf16, #tpu.memory_space<vmem>>, %arg11: memref<24x1xf32, #tpu.memory_space<vmem>>, %arg12: memref<3x1xf32, #tpu.memory_space<vmem>>, %arg13: memref<3x24xbf16, #tpu.memory_space<vmem>>, %arg14: memref<3x1xf32, #tpu.memory_space<vmem>>, %arg15: memref<1x3x128xf32, #tpu.memory_space<vmem>>) attributes {dimension_semantics = [#tpu.dimension_semantics<parallel>, #tpu.dimension_semantics<parallel>], iteration_bounds = array<i64: 2, 1>, scalar_prefetch = 0 : i64, scratch_operands = 0 : i64, tpu.core_type = #tpu.core_type<tc>, window_params = [{transform_indices = @transform_0, window_bounds = array<i64: 1, 3, 128>}, {transform_indices = @transform_1, window_bounds = array<i64: 1, 12, 128>}, {pipeline_mode = #tpu.pipeline_mode<synchronous>, transform_indices = @transform_2, window_bounds = array<i64: 8, 3>}, {pipeline_mode = #tpu.pipeline_mode<synchronous>, transform_indices = @transform_3, window_bounds = array<i64: 8, 1>}, {pipeline_mode = #tpu.pipeline_mode<synchronous>, transform_indices = @transform_4, window_bounds = array<i64: 24, 8>}, {pipeline_mode = #tpu.pipeline_mode<synchronous>, transform_indices = @transform_5, window_bounds = array<i64: 24, 1>}, {pipeline_mode = #tpu.pipeline_mode<synchronous>, transform_indices = @transform_6, window_bounds = array<i64: 3, 24>}, {pipeline_mode = #tpu.pipeline_mode<synchronous>, transform_indices = @transform_7, window_bounds = array<i64: 3, 1>}, {pipeline_mode = #tpu.pipeline_mode<synchronous>, transform_indices = @transform_8, window_bounds = array<i64: 24, 12>}, {pipeline_mode = #tpu.pipeline_mode<synchronous>, transform_indices = @transform_9, window_bounds = array<i64: 24, 1>}, {pipeline_mode = #tpu.pipeline_mode<synchronous>, transform_indices = @transform_10, window_bounds = array<i64: 3, 1>}, {pipeline_mode = #tpu.pipeline_mode<synchronous>, transform_indices = @transform_11, window_bounds = array<i64: 3, 24>}, {pipeline_mode = #tpu.pipeline_mode<synchronous>, transform_indices = @transform_12, window_bounds = array<i64: 3, 1>}, {transform_indices = @transform_13, window_bounds = array<i64: 1, 3, 128>}]} {
    %c0 = arith.constant 0 : index
    %c0_0 = arith.constant 0 : index
    %c0_1 = arith.constant 0 : index
    %0 = vector.load %arg2[%c0, %c0_0, %c0_1] : memref<1x3x128xbf16, #tpu.memory_space<vmem>>, vector<1x3x128xbf16>
    %1 = vector.shape_cast %0 : vector<1x3x128xbf16> to vector<3x128xbf16>
    %c0_2 = arith.constant 0 : index
    %c0_3 = arith.constant 0 : index
    %c0_4 = arith.constant 0 : index
    %2 = vector.load %arg3[%c0_2, %c0_3, %c0_4] : memref<1x12x128xbf16, #tpu.memory_space<vmem>>, vector<1x12x128xbf16>
    %3 = vector.shape_cast %2 : vector<1x12x128xbf16> to vector<12x128xbf16>
    %c0_5 = arith.constant 0 : index
    %c0_6 = arith.constant 0 : index
    %4 = vector.load %arg4[%c0_5, %c0_6] : memref<8x3xbf16, #tpu.memory_space<vmem>>, vector<8x3xbf16>
    %cst = arith.constant dense<0.000000e+00> : vector<8x128xf32>
    %5 = tpu.matmul %4, %1, %cst {dimension_numbers = #tpu.dot_dimension_numbers<[1], [0], [0], [1], [0, 0, 1, 1], [], []>} : vector<8x3xbf16>, vector<3x128xbf16>, vector<8x128xf32> -> vector<8x128xf32>
    %c0_7 = arith.constant 0 : index
    %c0_8 = arith.constant 0 : index
    %6 = vector.load %arg5[%c0_7, %c0_8] : memref<8x1xf32, #tpu.memory_space<vmem>>, vector<8x1xf32>
    %7 = vector.broadcast %6 : vector<8x1xf32> to vector<8x128xf32>
    %8 = arith.addf %5, %7 : vector<8x128xf32>
    %cst_9 = arith.constant 0.000000e+00 : f32
    %9 = vector.broadcast %cst_9 : f32 to vector<8x128xf32>
    %10 = arith.maximumf %8, %9 : vector<8x128xf32>
    %c0_10 = arith.constant 0 : index
    %c0_11 = arith.constant 0 : index
    %11 = vector.load %arg6[%c0_10, %c0_11] : memref<24x8xbf16, #tpu.memory_space<vmem>>, vector<24x8xbf16>
    %12 = arith.truncf %10 : vector<8x128xf32> to vector<8x128xbf16>
    %cst_12 = arith.constant dense<0.000000e+00> : vector<24x128xf32>
    %13 = tpu.matmul %11, %12, %cst_12 {dimension_numbers = #tpu.dot_dimension_numbers<[1], [0], [0], [1], [0, 0, 1, 1], [], []>} : vector<24x8xbf16>, vector<8x128xbf16>, vector<24x128xf32> -> vector<24x128xf32>
    %c0_13 = arith.constant 0 : index
    %c0_14 = arith.constant 0 : index
    %14 = vector.load %arg7[%c0_13, %c0_14] : memref<24x1xf32, #tpu.memory_space<vmem>>, vector<24x1xf32>
    %15 = vector.broadcast %14 : vector<24x1xf32> to vector<24x128xf32>
    %16 = arith.addf %13, %15 : vector<24x128xf32>
    %cst_15 = arith.constant 0.000000e+00 : f32
    %17 = vector.broadcast %cst_15 : f32 to vector<24x128xf32>
    %18 = arith.maximumf %16, %17 : vector<24x128xf32>
    %19 = vector.broadcast %cst_15 : f32 to vector<24x128xf32>
    %20 = arith.subf %16, %19 : vector<24x128xf32>
    %21 = arith.cmpf one, %20, %20 : vector<24x128xf32>
    %22 = vector.broadcast %cst_15 : f32 to vector<24x128xf32>
    %23 = arith.addf %16, %22 : vector<24x128xf32>
    %24 = math.absf %20 : vector<24x128xf32>
    %cst_16 = arith.constant 0.000000e+00 : f32
    %25 = vector.broadcast %cst_16 : f32 to vector<24x128xf32>
    %26 = arith.subf %25, %24 : vector<24x128xf32>
    %27 = math.exp %26 : vector<24x128xf32>
    %28 = math.log1p %27 : vector<24x128xf32>
    %29 = arith.addf %18, %28 : vector<24x128xf32>
    %30 = arith.select %21, %23, %29 : vector<24x128xi1>, vector<24x128xf32>
    %c0_17 = arith.constant 0 : index
    %c0_18 = arith.constant 0 : index
    %31 = vector.load %arg8[%c0_17, %c0_18] : memref<3x24xbf16, #tpu.memory_space<vmem>>, vector<3x24xbf16>
    %32 = arith.truncf %30 : vector<24x128xf32> to vector<24x128xbf16>
    %cst_19 = arith.constant dense<0.000000e+00> : vector<3x128xf32>
    %33 = tpu.matmul %31, %32, %cst_19 {dimension_numbers = #tpu.dot_dimension_numbers<[1], [0], [0], [1], [0, 0, 1, 1], [], []>} : vector<3x24xbf16>, vector<24x128xbf16>, vector<3x128xf32> -> vector<3x128xf32>
    %c0_20 = arith.constant 0 : index
    %c0_21 = arith.constant 0 : index
    %34 = vector.load %arg9[%c0_20, %c0_21] : memref<3x1xf32, #tpu.memory_space<vmem>>, vector<3x1xf32>
    %35 = vector.broadcast %34 : vector<3x1xf32> to vector<3x128xf32>
    %36 = arith.addf %33, %35 : vector<3x128xf32>
    %cst_22 = arith.constant 0.000000e+00 : f32
    %37 = vector.broadcast %cst_22 : f32 to vector<3x128xf32>
    %38 = arith.maximumf %36, %37 : vector<3x128xf32>
    %39 = vector.broadcast %cst_22 : f32 to vector<3x128xf32>
    %40 = arith.subf %36, %39 : vector<3x128xf32>
    %41 = arith.cmpf one, %40, %40 : vector<3x128xf32>
    %42 = vector.broadcast %cst_22 : f32 to vector<3x128xf32>
    %43 = arith.addf %36, %42 : vector<3x128xf32>
    %44 = math.absf %40 : vector<3x128xf32>
    %cst_23 = arith.constant 0.000000e+00 : f32
    %45 = vector.broadcast %cst_23 : f32 to vector<3x128xf32>
    %46 = arith.subf %45, %44 : vector<3x128xf32>
    %47 = math.exp %46 : vector<3x128xf32>
    %48 = math.log1p %47 : vector<3x128xf32>
    %49 = arith.addf %38, %48 : vector<3x128xf32>
    %50 = arith.select %41, %43, %49 : vector<3x128xi1>, vector<3x128xf32>
    %c0_24 = arith.constant 0 : index
    %c0_25 = arith.constant 0 : index
    %51 = vector.load %arg10[%c0_24, %c0_25] : memref<24x12xbf16, #tpu.memory_space<vmem>>, vector<24x12xbf16>
    %cst_26 = arith.constant dense<0.000000e+00> : vector<24x128xf32>
    %52 = tpu.matmul %51, %3, %cst_26 {dimension_numbers = #tpu.dot_dimension_numbers<[1], [0], [0], [1], [0, 0, 1, 1], [], []>} : vector<24x12xbf16>, vector<12x128xbf16>, vector<24x128xf32> -> vector<24x128xf32>
    %c0_27 = arith.constant 0 : index
    %c0_28 = arith.constant 0 : index
    %53 = vector.load %arg11[%c0_27, %c0_28] : memref<24x1xf32, #tpu.memory_space<vmem>>, vector<24x1xf32>
    %54 = vector.broadcast %53 : vector<24x1xf32> to vector<24x128xf32>
    %55 = arith.addf %52, %54 : vector<24x128xf32>
    %cst_29 = arith.constant 0.000000e+00 : f32
    %56 = vector.broadcast %cst_29 : f32 to vector<24x128xf32>
    %57 = arith.maximumf %55, %56 : vector<24x128xf32>
    %58 = vector.broadcast %cst_29 : f32 to vector<24x128xf32>
    %59 = arith.subf %55, %58 : vector<24x128xf32>
    %60 = arith.cmpf one, %59, %59 : vector<24x128xf32>
    %61 = vector.broadcast %cst_29 : f32 to vector<24x128xf32>
    %62 = arith.addf %55, %61 : vector<24x128xf32>
    %63 = math.absf %59 : vector<24x128xf32>
    %cst_30 = arith.constant 0.000000e+00 : f32
    %64 = vector.broadcast %cst_30 : f32 to vector<24x128xf32>
    %65 = arith.subf %64, %63 : vector<24x128xf32>
    %66 = math.exp %65 : vector<24x128xf32>
    %67 = math.log1p %66 : vector<24x128xf32>
    %68 = arith.addf %57, %67 : vector<24x128xf32>
    %69 = arith.select %60, %62, %68 : vector<24x128xi1>, vector<24x128xf32>
    %c0_31 = arith.constant 0 : index
    %c0_32 = arith.constant 0 : index
    %70 = vector.load %arg12[%c0_31, %c0_32] : memref<3x1xf32, #tpu.memory_space<vmem>>, vector<3x1xf32>
    %71 = vector.broadcast %70 : vector<3x1xf32> to vector<3x128xf32>
    %72 = arith.mulf %50, %71 : vector<3x128xf32>
    %c0_33 = arith.constant 0 : index
    %c0_34 = arith.constant 0 : index
    %73 = vector.load %arg13[%c0_33, %c0_34] : memref<3x24xbf16, #tpu.memory_space<vmem>>, vector<3x24xbf16>
    %74 = arith.truncf %69 : vector<24x128xf32> to vector<24x128xbf16>
    %cst_35 = arith.constant dense<0.000000e+00> : vector<3x128xf32>
    %75 = tpu.matmul %73, %74, %cst_35 {dimension_numbers = #tpu.dot_dimension_numbers<[1], [0], [0], [1], [0, 0, 1, 1], [], []>} : vector<3x24xbf16>, vector<24x128xbf16>, vector<3x128xf32> -> vector<3x128xf32>
    %76 = arith.addf %72, %75 : vector<3x128xf32>
    %c0_36 = arith.constant 0 : index
    %c0_37 = arith.constant 0 : index
    %77 = vector.load %arg14[%c0_36, %c0_37] : memref<3x1xf32, #tpu.memory_space<vmem>>, vector<3x1xf32>
    %78 = vector.broadcast %77 : vector<3x1xf32> to vector<3x128xf32>
    %79 = arith.addf %76, %78 : vector<3x128xf32>
    %c0_38 = arith.constant 0 : index
    %c0_39 = arith.constant 0 : index
    %c0_40 = arith.constant 0 : index
    %80 = vector.load %arg15[%c0_38, %c0_39, %c0_40] : memref<1x3x128xf32, #tpu.memory_space<vmem>>, vector<1x3x128xf32>
    %81 = vector.shape_cast %80 : vector<1x3x128xf32> to vector<3x128xf32>
    %82 = vector.shape_cast %79 : vector<3x128xf32> to vector<1x3x128xf32>
    tpu.vector_store %arg15[%c0_38, %c0_39, %c0_40], %82 {strides = array<i32>} : memref<1x3x128xf32, #tpu.memory_space<vmem>>, vector<1x3x128xf32>,
    return
  }
  func.func @transform_0(%arg0: i32, %arg1: i32) -> (i32, i32, i32) {
    %c0_i32 = arith.constant 0 : i32
    %c0_i32_0 = arith.constant 0 : i32
    return %arg0, %c0_i32, %arg1 : i32, i32, i32
  }
  func.func @transform_1(%arg0: i32, %arg1: i32) -> (i32, i32, i32) {
    %c0_i32 = arith.constant 0 : i32
    %c0_i32_0 = arith.constant 0 : i32
    return %arg0, %c0_i32, %arg1 : i32, i32, i32
  }
  func.func @transform_2(%arg0: i32, %arg1: i32) -> (i32, i32) {
    %c0_i32 = arith.constant 0 : i32
    %c0_i32_0 = arith.constant 0 : i32
    %c0_i32_1 = arith.constant 0 : i32
    return %c0_i32, %c0_i32_0 : i32, i32
  }
  func.func @transform_3(%arg0: i32, %arg1: i32) -> (i32, i32) {
    %c0_i32 = arith.constant 0 : i32
    %c0_i32_0 = arith.constant 0 : i32
    %c0_i32_1 = arith.constant 0 : i32
    return %c0_i32, %c0_i32_0 : i32, i32
  }
  func.func @transform_4(%arg0: i32, %arg1: i32) -> (i32, i32) {
    %c0_i32 = arith.constant 0 : i32
    %c0_i32_0 = arith.constant 0 : i32
    %c0_i32_1 = arith.constant 0 : i32
    return %c0_i32, %c0_i32_0 : i32, i32
  }
  func.func @transform_5(%arg0: i32, %arg1: i32) -> (i32, i32) {
    %c0_i32 = arith.constant 0 : i32
    %c0_i32_0 = arith.constant 0 : i32
    %c0_i32_1 = arith.constant 0 : i32
    return %c0_i32, %c0_i32_0 : i32, i32
  }
  func.func @transform_6(%arg0: i32, %arg1: i32) -> (i32, i32) {
    %c0_i32 = arith.constant 0 : i32
    %c0_i32_0 = arith.constant 0 : i32
    %c0_i32_1 = arith.constant 0 : i32
    return %c0_i32, %c0_i32_0 : i32, i32
  }
  func.func @transform_7(%arg0: i32, %arg1: i32) -> (i32, i32) {
    %c0_i32 = arith.constant 0 : i32
    %c0_i32_0 = arith.constant 0 : i32
    %c0_i32_1 = arith.constant 0 : i32
    return %c0_i32, %c0_i32_0 : i32, i32
  }
  func.func @transform_8(%arg0: i32, %arg1: i32) -> (i32, i32) {
    %c0_i32 = arith.constant 0 : i32
    %c0_i32_0 = arith.constant 0 : i32
    %c0_i32_1 = arith.constant 0 : i32
    return %c0_i32, %c0_i32_0 : i32, i32
  }
  func.func @transform_9(%arg0: i32, %arg1: i32) -> (i32, i32) {
    %c0_i32 = arith.constant 0 : i32
    %c0_i32_0 = arith.constant 0 : i32
    %c0_i32_1 = arith.constant 0 : i32
    return %c0_i32, %c0_i32_0 : i32, i32
  }
  func.func @transform_10(%arg0: i32, %arg1: i32) -> (i32, i32) {
    %c0_i32 = arith.constant 0 : i32
    %c0_i32_0 = arith.constant 0 : i32
    %c0_i32_1 = arith.constant 0 : i32
    return %c0_i32, %c0_i32_0 : i32, i32
  }
  func.func @transform_11(%arg0: i32, %arg1: i32) -> (i32, i32) {
    %c0_i32 = arith.constant 0 : i32
    %c0_i32_0 = arith.constant 0 : i32
    %c0_i32_1 = arith.constant 0 : i32
    return %c0_i32, %c0_i32_0 : i32, i32
  }
  func.func @transform_12(%arg0: i32, %arg1: i32) -> (i32, i32) {
    %c0_i32 = arith.constant 0 : i32
    %c0_i32_0 = arith.constant 0 : i32
    %c0_i32_1 = arith.constant 0 : i32
    return %c0_i32, %c0_i32_0 : i32, i32
  }
  func.func @transform_13(%arg0: i32, %arg1: i32) -> (i32, i32, i32) {
    %c0_i32 = arith.constant 0 : i32
    %c0_i32_0 = arith.constant 0 : i32
    return %arg0, %c0_i32, %arg1 : i32, i32, i32
  }
}

</mosaic_0001>

<llo_original>
// kernel: tpu_custom_call.1
$region0: #{tpu_custom_call.1}
  #allocation0 [shape = 'u32[]', space=smem, size = 0x4, offset = 0x4, fixed_abs, tag = 'smem constant byte address 0x4 - core index']
  #allocation1 [shape = 'u32[144,128]{1,0:T(1,128)}', space=vmem, size = 0x12000, scoped, tag = 'internal scratch']
  %s0 = inlined_call_operand.vmem [shape: bf16[2,3,128], index: 0, kind: input, shape index: {}]
  %s1 = inlined_call_operand.vmem [shape: bf16[2,12,128], index: 1, kind: input, shape index: {}]
  %s2 = inlined_call_operand.vmem [shape: bf16[8,3], index: 2, kind: input, shape index: {}]
  %s3 = inlined_call_operand.vmem [shape: f32[8,1], index: 3, kind: input, shape index: {}]
  %s4 = inlined_call_operand.vmem [shape: bf16[24,8], index: 4, kind: input, shape index: {}]
  %s5 = inlined_call_operand.vmem [shape: f32[24,1], index: 5, kind: input, shape index: {}]
  %s6 = inlined_call_operand.vmem [shape: bf16[3,24], index: 6, kind: input, shape index: {}]
  %s7 = inlined_call_operand.vmem [shape: f32[3,1], index: 7, kind: input, shape index: {}]
  %s8 = inlined_call_operand.vmem [shape: bf16[24,12], index: 8, kind: input, shape index: {}]
  %s9 = inlined_call_operand.vmem [shape: f32[24,1], index: 9, kind: input, shape index: {}]
  %s10 = inlined_call_operand.vmem [shape: f32[3,1], index: 10, kind: input, shape index: {}]
  %s11 = inlined_call_operand.vmem [shape: bf16[3,24], index: 11, kind: input, shape index: {}]
  %s12 = inlined_call_operand.vmem [shape: f32[3,1], index: 12, kind: input, shape index: {}]
  %s13 = inlined_call_operand.vmem [shape: f32[2,3,128], index: 13, kind: output, shape index: {}]
  %s14 = sld [smem:[#allocation0]]
  $region85: #{tpu_custom_call.1} parent=0
    _
  %s16 = ssub.s32 1, %s14
  %s17 = scalar_select 0, %s16, %s14
  loop: start=0, step=1, limit=4
  $region2: #{tpu_custom_call.1} parent=0 // loop_pre_header
    _
  $region3: #{tpu_custom_call.1} parent=0 // loop_header
    %s19 = sphi 0, %s23
    %p20 = scmp.ge.s32.totalorder %s19, 4
    %s26 = sphi 0, %s38
    %s27 = sphi 0, %s34
    %s28 = sphi 0, %s26
    %s29 = sphi 0, %s27
    %s30 = sphi 0, %s28
    %s31 = sphi 0, %s29
    %s43 = sphi 0, %s45
    %s46 = sphi 0, %s43
    %s47 = sphi 0, %s46
    %s63 = sphi 0, %s47
    %s71 = sphi 0, %s73
    %s74 = sphi 0, %s71
    %s75 = sphi 0, %s74
    %s91 = sphi 0, %s75
    %s95 = sphi 0, %s95
    %s97 = sphi 0, %s95
    %s98 = sphi 0, %s97
    %s112 = sphi 0, %s98
    %s116 = sphi 0, %s116
    %s118 = sphi 0, %s116
    %s119 = sphi 0, %s118
    %s133 = sphi 0, %s119
    %s137 = sphi 0, %s137
    %s139 = sphi 0, %s137
    %s140 = sphi 0, %s139
    %s154 = sphi 0, %s140
    %s158 = sphi 0, %s158
    %s160 = sphi 0, %s158
    %s161 = sphi 0, %s160
    %s175 = sphi 0, %s161
    %s179 = sphi 0, %s179
    %s181 = sphi 0, %s179
    %s182 = sphi 0, %s181
    %s196 = sphi 0, %s182
    %s200 = sphi 0, %s200
    %s202 = sphi 0, %s200
    %s203 = sphi 0, %s202
    %s217 = sphi 0, %s203
    %s221 = sphi 0, %s221
    %s223 = sphi 0, %s221
    %s224 = sphi 0, %s223
    %s238 = sphi 0, %s224
    %s242 = sphi 0, %s242
    %s244 = sphi 0, %s242
    %s245 = sphi 0, %s244
    %s259 = sphi 0, %s245
    %s263 = sphi 0, %s263
    %s265 = sphi 0, %s263
    %s266 = sphi 0, %s265
    %s280 = sphi 0, %s266
    %s284 = sphi 0, %s284
    %s286 = sphi 0, %s284
    %s287 = sphi 0, %s286
    %s301 = sphi 0, %s287
    %s305 = sphi 0, %s305
    %s307 = sphi 0, %s305
    %s308 = sphi 0, %s307
    %s322 = sphi 0, %s308
    %s330 = sphi 0, %s332
    %s333 = sphi 0, %s330
    %s334 = sphi 0, %s333
    %s350 = sphi 0, %s334
  $region4: #{tpu_custom_call.1} parent=0 // loop_header_branch
    %22 = sbr.rel (%p20) target = $region8
  $region5: #{tpu_custom_call.1} parent=0 // loop_body
    %s24 = ssub.s32 %s19, 1
    %s25 = ssub.s32 %s19, 2
    %s32 = sadd.s32 1, %s27
    %p33 = scmp.ge.s32.totalorder %s32, 1
    %s34 = scalar_select %p33, 0, %s32
    %s35 = sadd.s32 1, %s26
    %s36 = scalar_select %p33, %s35, %s26
    %p37 = scmp.ge.s32.totalorder %s36, 2
    %s38 = scalar_select %p37, 0, %s36
    %s39 = ssub.s32 %s26, %s38
    %s40 = ssub.s32 %s27, %s34
    %s41 = sor.u32 %s39, %s40
    %p42 = scmp.eq.s32.totalorder %s41, 0
    %s44 = sadd.s32 %s43, 1
    %s45 = scalar_select %p42, %s43, %s44
    %p48 = pneg %p42
    %p49 = scmp.eq.s32.totalorder %s19, 1
    %p50 = por %p48, %p49
    %p51 = scmp.ne.s32.totalorder %s43, %s46
    %p52 = scmp.eq.s32.totalorder %s19, 0
    %p53 = por %p51, %p52
    %p54 = scmp.ne.s32.totalorder %s43, %s46
    %p55 = scmp.eq.s32.totalorder %s24, 1
    %p56 = por %p54, %p55
    %p57 = scmp.ne.s32.totalorder %s46, %s47
    %p58 = scmp.eq.s32.totalorder %s24, 0
    %p59 = por %p57, %p58
    %p60 = scmp.ne.s32.totalorder %s46, %s47
    %p61 = scmp.eq.s32.totalorder %s25, 1
    %p62 = por %p60, %p61
    %p64 = scmp.ne.s32.totalorder %s47, %s63
    %p65 = scmp.eq.s32.totalorder %s25, 0
    %p66 = por %p64, %p65
    %s67 = ssub.s32 %s26, %s38
    %s68 = ssub.s32 %s27, %s34
    %s69 = sor.u32 %s67, %s68
    %p70 = scmp.eq.s32.totalorder %s69, 0
    %s72 = sadd.s32 %s71, 1
    %s73 = scalar_select %p70, %s71, %s72
    %p76 = pneg %p70
    %p77 = scmp.eq.s32.totalorder %s19, 1
    %p78 = por %p76, %p77
    %p79 = scmp.ne.s32.totalorder %s71, %s74
    %p80 = scmp.eq.s32.totalorder %s19, 0
    %p81 = por %p79, %p80
    %p82 = scmp.ne.s32.totalorder %s71, %s74
    %p83 = scmp.eq.s32.totalorder %s24, 1
    %p84 = por %p82, %p83
    %p85 = scmp.ne.s32.totalorder %s74, %s75
    %p86 = scmp.eq.s32.totalorder %s24, 0
    %p87 = por %p85, %p86
    %p88 = scmp.ne.s32.totalorder %s74, %s75
    %p89 = scmp.eq.s32.totalorder %s25, 1
    %p90 = por %p88, %p89
    %p92 = scmp.ne.s32.totalorder %s75, %s91
    %p93 = scmp.eq.s32.totalorder %s25, 0
    %p94 = por %p92, %p93
    %s96 = sadd.s32 %s95, 1
    %p99 = scmp.eq.s32.totalorder %s19, 1
    %p100 = scmp.ne.s32.totalorder %s95, %s97
    %p101 = scmp.eq.s32.totalorder %s19, 0
    %p102 = por %p100, %p101
    %p103 = scmp.ne.s32.totalorder %s95, %s97
    %p104 = scmp.eq.s32.totalorder %s24, 1
    %p105 = por %p103, %p104
    %p106 = scmp.ne.s32.totalorder %s97, %s98
    %p107 = scmp.eq.s32.totalorder %s24, 0
    %p108 = por %p106, %p107
    %p109 = scmp.ne.s32.totalorder %s97, %s98
    %p110 = scmp.eq.s32.totalorder %s25, 1
    %p111 = por %p109, %p110
    %p113 = scmp.ne.s32.totalorder %s98, %s112
    %p114 = scmp.eq.s32.totalorder %s25, 0
    %p115 = por %p113, %p114
    %s117 = sadd.s32 %s116, 1
    %p120 = scmp.eq.s32.totalorder %s19, 1
    %p121 = scmp.ne.s32.totalorder %s116, %s118
    %p122 = scmp.eq.s32.totalorder %s19, 0
    %p123 = por %p121, %p122
    %p124 = scmp.ne.s32.totalorder %s116, %s118
    %p125 = scmp.eq.s32.totalorder %s24, 1
    %p126 = por %p124, %p125
    %p127 = scmp.ne.s32.totalorder %s118, %s119
    %p128 = scmp.eq.s32.totalorder %s24, 0
    %p129 = por %p127, %p128
    %p130 = scmp.ne.s32.totalorder %s118, %s119
    %p131 = scmp.eq.s32.totalorder %s25, 1
    %p132 = por %p130, %p131
    %p134 = scmp.ne.s32.totalorder %s119, %s133
    %p135 = scmp.eq.s32.totalorder %s25, 0
    %p136 = por %p134, %p135
    %s138 = sadd.s32 %s137, 1
    %p141 = scmp.eq.s32.totalorder %s19, 1
    %p142 = scmp.ne.s32.totalorder %s137, %s139
    %p143 = scmp.eq.s32.totalorder %s19, 0
    %p144 = por %p142, %p143
    %p145 = scmp.ne.s32.totalorder %s137, %s139
    %p146 = scmp.eq.s32.totalorder %s24, 1
    %p147 = por %p145, %p146
    %p148 = scmp.ne.s32.totalorder %s139, %s140
    %p149 = scmp.eq.s32.totalorder %s24, 0
    %p150 = por %p148, %p149
    %p151 = scmp.ne.s32.totalorder %s139, %s140
    %p152 = scmp.eq.s32.totalorder %s25, 1
    %p153 = por %p151, %p152
    %p155 = scmp.ne.s32.totalorder %s140, %s154
    %p156 = scmp.eq.s32.totalorder %s25, 0
    %p157 = por %p155, %p156
    %s159 = sadd.s32 %s158, 1
    %p162 = scmp.eq.s32.totalorder %s19, 1
    %p163 = scmp.ne.s32.totalorder %s158, %s160
    %p164 = scmp.eq.s32.totalorder %s19, 0
    %p165 = por %p163, %p164
    %p166 = scmp.ne.s32.totalorder %s158, %s160
    %p167 = scmp.eq.s32.totalorder %s24, 1
    %p168 = por %p166, %p167
    %p169 = scmp.ne.s32.totalorder %s160, %s161
    %p170 = scmp.eq.s32.totalorder %s24, 0
    %p171 = por %p169, %p170
    %p172 = scmp.ne.s32.totalorder %s160, %s161
    %p173 = scmp.eq.s32.totalorder %s25, 1
    %p174 = por %p172, %p173
    %p176 = scmp.ne.s32.totalorder %s161, %s175
    %p177 = scmp.eq.s32.totalorder %s25, 0
    %p178 = por %p176, %p177
    %s180 = sadd.s32 %s179, 1
    %p183 = scmp.eq.s32.totalorder %s19, 1
    %p184 = scmp.ne.s32.totalorder %s179, %s181
    %p185 = scmp.eq.s32.totalorder %s19, 0
    %p186 = por %p184, %p185
    %p187 = scmp.ne.s32.totalorder %s179, %s181
    %p188 = scmp.eq.s32.totalorder %s24, 1
    %p189 = por %p187, %p188
    %p190 = scmp.ne.s32.totalorder %s181, %s182
    %p191 = scmp.eq.s32.totalorder %s24, 0
    %p192 = por %p190, %p191
    %p193 = scmp.ne.s32.totalorder %s181, %s182
    %p194 = scmp.eq.s32.totalorder %s25, 1
    %p195 = por %p193, %p194
    %p197 = scmp.ne.s32.totalorder %s182, %s196
    %p198 = scmp.eq.s32.totalorder %s25, 0
    %p199 = por %p197, %p198
    %s201 = sadd.s32 %s200, 1
    %p204 = scmp.eq.s32.totalorder %s19, 1
    %p205 = scmp.ne.s32.totalorder %s200, %s202
    %p206 = scmp.eq.s32.totalorder %s19, 0
    %p207 = por %p205, %p206
    %p208 = scmp.ne.s32.totalorder %s200, %s202
    %p209 = scmp.eq.s32.totalorder %s24, 1
    %p210 = por %p208, %p209
    %p211 = scmp.ne.s32.totalorder %s202, %s203
    %p212 = scmp.eq.s32.totalorder %s24, 0
    %p213 = por %p211, %p212
    %p214 = scmp.ne.s32.totalorder %s202, %s203
    %p215 = scmp.eq.s32.totalorder %s25, 1
    %p216 = por %p214, %p215
    %p218 = scmp.ne.s32.totalorder %s203, %s217
    %p219 = scmp.eq.s32.totalorder %s25, 0
    %p220 = por %p218, %p219
    %s222 = sadd.s32 %s221, 1
    %p225 = scmp.eq.s32.totalorder %s19, 1
    %p226 = scmp.ne.s32.totalorder %s221, %s223
    %p227 = scmp.eq.s32.totalorder %s19, 0
    %p228 = por %p226, %p227
    %p229 = scmp.ne.s32.totalorder %s221, %s223
    %p230 = scmp.eq.s32.totalorder %s24, 1
    %p231 = por %p229, %p230
    %p232 = scmp.ne.s32.totalorder %s223, %s224
    %p233 = scmp.eq.s32.totalorder %s24, 0
    %p234 = por %p232, %p233
    %p235 = scmp.ne.s32.totalorder %s223, %s224
    %p236 = scmp.eq.s32.totalorder %s25, 1
    %p237 = por %p235, %p236
    %p239 = scmp.ne.s32.totalorder %s224, %s238
    %p240 = scmp.eq.s32.totalorder %s25, 0
    %p241 = por %p239, %p240
    %s243 = sadd.s32 %s242, 1
    %p246 = scmp.eq.s32.totalorder %s19, 1
    %p247 = scmp.ne.s32.totalorder %s242, %s244
    %p248 = scmp.eq.s32.totalorder %s19, 0
    %p249 = por %p247, %p248
    %p250 = scmp.ne.s32.totalorder %s242, %s244
    %p251 = scmp.eq.s32.totalorder %s24, 1
    %p252 = por %p250, %p251
    %p253 = scmp.ne.s32.totalorder %s244, %s245
    %p254 = scmp.eq.s32.totalorder %s24, 0
    %p255 = por %p253, %p254
    %p256 = scmp.ne.s32.totalorder %s244, %s245
    %p257 = scmp.eq.s32.totalorder %s25, 1
    %p258 = por %p256, %p257
    %p260 = scmp.ne.s32.totalorder %s245, %s259
    %p261 = scmp.eq.s32.totalorder %s25, 0
    %p262 = por %p260, %p261
    %s264 = sadd.s32 %s263, 1
    %p267 = scmp.eq.s32.totalorder %s19, 1
    %p268 = scmp.ne.s32.totalorder %s263, %s265
    %p269 = scmp.eq.s32.totalorder %s19, 0
    %p270 = por %p268, %p269
    %p271 = scmp.ne.s32.totalorder %s263, %s265
    %p272 = scmp.eq.s32.totalorder %s24, 1
    %p273 = por %p271, %p272
    %p274 = scmp.ne.s32.totalorder %s265, %s266
    %p275 = scmp.eq.s32.totalorder %s24, 0
    %p276 = por %p274, %p275
    %p277 = scmp.ne.s32.totalorder %s265, %s266
    %p278 = scmp.eq.s32.totalorder %s25, 1
    %p279 = por %p277, %p278
    %p281 = scmp.ne.s32.totalorder %s266, %s280
    %p282 = scmp.eq.s32.totalorder %s25, 0
    %p283 = por %p281, %p282
    %s285 = sadd.s32 %s284, 1
    %p288 = scmp.eq.s32.totalorder %s19, 1
    %p289 = scmp.ne.s32.totalorder %s284, %s286
    %p290 = scmp.eq.s32.totalorder %s19, 0
    %p291 = por %p289, %p290
    %p292 = scmp.ne.s32.totalorder %s284, %s286
    %p293 = scmp.eq.s32.totalorder %s24, 1
    %p294 = por %p292, %p293
    %p295 = scmp.ne.s32.totalorder %s286, %s287
    %p296 = scmp.eq.s32.totalorder %s24, 0
    %p297 = por %p295, %p296
    %p298 = scmp.ne.s32.totalorder %s286, %s287
    %p299 = scmp.eq.s32.totalorder %s25, 1
    %p300 = por %p298, %p299
    %p302 = scmp.ne.s32.totalorder %s287, %s301
    %p303 = scmp.eq.s32.totalorder %s25, 0
    %p304 = por %p302, %p303
    %s306 = sadd.s32 %s305, 1
    %p309 = scmp.eq.s32.totalorder %s19, 1
    %p310 = scmp.ne.s32.totalorder %s305, %s307
    %p311 = scmp.eq.s32.totalorder %s19, 0
    %p312 = por %p310, %p311
    %p313 = scmp.ne.s32.totalorder %s305, %s307
    %p314 = scmp.eq.s32.totalorder %s24, 1
    %p315 = por %p313, %p314
    %p316 = scmp.ne.s32.totalorder %s307, %s308
    %p317 = scmp.eq.s32.totalorder %s24, 0
    %p318 = por %p316, %p317
    %p319 = scmp.ne.s32.totalorder %s307, %s308
    %p320 = scmp.eq.s32.totalorder %s25, 1
    %p321 = por %p319, %p320
    %p323 = scmp.ne.s32.totalorder %s308, %s322
    %p324 = scmp.eq.s32.totalorder %s25, 0
    %p325 = por %p323, %p324
    %s326 = ssub.s32 %s26, %s38
    %s327 = ssub.s32 %s27, %s34
    %s328 = sor.u32 %s326, %s327
    %p329 = scmp.eq.s32.totalorder %s328, 0
    %s331 = sadd.s32 %s330, 1
    %s332 = scalar_select %p329, %s330, %s331
    %p335 = pneg %p329
    %p336 = scmp.eq.s32.totalorder %s19, 1
    %p337 = por %p335, %p336
    %p338 = scmp.ne.s32.totalorder %s330, %s333
    %p339 = scmp.eq.s32.totalorder %s19, 0
    %p340 = por %p338, %p339
    %p341 = scmp.ne.s32.totalorder %s330, %s333
    %p342 = scmp.eq.s32.totalorder %s24, 1
    %p343 = por %p341, %p342
    %p344 = scmp.ne.s32.totalorder %s333, %s334
    %p345 = scmp.eq.s32.totalorder %s24, 0
    %p346 = por %p344, %p345
    %p347 = scmp.ne.s32.totalorder %s333, %s334
    %p348 = scmp.eq.s32.totalorder %s25, 1
    %p349 = por %p347, %p348
    %p351 = scmp.ne.s32.totalorder %s334, %s350
    %p352 = scmp.eq.s32.totalorder %s25, 0
    %p353 = por %p351, %p352
    %p354 = scmp.le.s32.totalorder 1, %s19
    %p355 = scmp.lt.s32.totalorder %s19, 3
    %p356 = pnand %p354, %p355
    %p357 = pneg %p356
    // Predicated region
    $region9: #{tpu_custom_call.1} parent=5 // pred_check
      _
    $region10: #{tpu_custom_call.1} parent=5 // pred_check_branch
      %359 = sbr.rel (%p356) target = $region12
    $region11: #{tpu_custom_call.1} parent=5 // pred_region
      %s360 = ssub.s32 %s19, 1
      // Predicated region
      $region13: #{tpu_custom_call.1} parent=11 // pred_check
        %p361 = pneg %p108
      $region14: #{tpu_custom_call.1} parent=11 // pred_check_branch
        %363 = sbr.rel (%p361) target = $region16
      $region15: #{tpu_custom_call.1} parent=11 // pred_region
        _
      $region16: #{tpu_custom_call.1} parent=11 // pred_fallthru
        _
      // Predicated region
      $region17: #{tpu_custom_call.1} parent=11 // pred_check
        %p364 = pneg %p129
      $region18: #{tpu_custom_call.1} parent=11 // pred_check_branch
        %366 = sbr.rel (%p364) target = $region20
      $region19: #{tpu_custom_call.1} parent=11 // pred_region
        _
      $region20: #{tpu_custom_call.1} parent=11 // pred_fallthru
        _
      // Predicated region
      $region21: #{tpu_custom_call.1} parent=11 // pred_check
        %p367 = pneg %p150
      $region22: #{tpu_custom_call.1} parent=11 // pred_check_branch
        %369 = sbr.rel (%p367) target = $region24
      $region23: #{tpu_custom_call.1} parent=11 // pred_region
        _
      $region24: #{tpu_custom_call.1} parent=11 // pred_fallthru
        _
      // Predicated region
      $region25: #{tpu_custom_call.1} parent=11 // pred_check
        %p370 = pneg %p171
      $region26: #{tpu_custom_call.1} parent=11 // pred_check_branch
        %372 = sbr.rel (%p370) target = $region28
      $region27: #{tpu_custom_call.1} parent=11 // pred_region
        _
      $region28: #{tpu_custom_call.1} parent=11 // pred_fallthru
        _
      // Predicated region
      $region29: #{tpu_custom_call.1} parent=11 // pred_check
        %p373 = pneg %p192
      $region30: #{tpu_custom_call.1} parent=11 // pred_check_branch
        %375 = sbr.rel (%p373) target = $region32
      $region31: #{tpu_custom_call.1} parent=11 // pred_region
        _
      $region32: #{tpu_custom_call.1} parent=11 // pred_fallthru
        _
      // Predicated region
      $region33: #{tpu_custom_call.1} parent=11 // pred_check
        %p376 = pneg %p213
      $region34: #{tpu_custom_call.1} parent=11 // pred_check_branch
        %378 = sbr.rel (%p376) target = $region36
      $region35: #{tpu_custom_call.1} parent=11 // pred_region
        _
      $region36: #{tpu_custom_call.1} parent=11 // pred_fallthru
        _
      // Predicated region
      $region37: #{tpu_custom_call.1} parent=11 // pred_check
        %p379 = pneg %p234
      $region38: #{tpu_custom_call.1} parent=11 // pred_check_branch
        %381 = sbr.rel (%p379) target = $region40
      $region39: #{tpu_custom_call.1} parent=11 // pred_region
        _
      $region40: #{tpu_custom_call.1} parent=11 // pred_fallthru
        _
      // Predicated region
      $region41: #{tpu_custom_call.1} parent=11 // pred_check
        %p382 = pneg %p255
      $region42: #{tpu_custom_call.1} parent=11 // pred_check_branch
        %384 = sbr.rel (%p382) target = $region44
      $region43: #{tpu_custom_call.1} parent=11 // pred_region
        _
      $region44: #{tpu_custom_call.1} parent=11 // pred_fallthru
        _
      // Predicated region
      $region45: #{tpu_custom_call.1} parent=11 // pred_check
        %p385 = pneg %p276
      $region46: #{tpu_custom_call.1} parent=11 // pred_check_branch
        %387 = sbr.rel (%p385) target = $region48
      $region47: #{tpu_custom_call.1} parent=11 // pred_region
        _
      $region48: #{tpu_custom_call.1} parent=11 // pred_fallthru
        _
      // Predicated region
      $region49: #{tpu_custom_call.1} parent=11 // pred_check
        %p388 = pneg %p297
      $region50: #{tpu_custom_call.1} parent=11 // pred_check_branch
        %390 = sbr.rel (%p388) target = $region52
      $region51: #{tpu_custom_call.1} parent=11 // pred_region
        _
      $region52: #{tpu_custom_call.1} parent=11 // pred_fallthru
        _
      // Predicated region
      $region53: #{tpu_custom_call.1} parent=11 // pred_check
        %p391 = pneg %p318
      $region54: #{tpu_custom_call.1} parent=11 // pred_check_branch
        %393 = sbr.rel (%p391) target = $region56
      $region55: #{tpu_custom_call.1} parent=11 // pred_region
        _
      $region56: #{tpu_custom_call.1} parent=11 // pred_fallthru
        _
    $region12: #{tpu_custom_call.1} parent=5 // pred_fallthru
      _
    %p394 = scmp.lt.s32.totalorder %s19, 2
    // Predicated region
    $region57: #{tpu_custom_call.1} parent=5 // pred_check
      %p395 = pneg %p394
    $region58: #{tpu_custom_call.1} parent=5 // pred_check_branch
      %397 = sbr.rel (%p395) target = $region60
    $region59: #{tpu_custom_call.1} parent=5 // pred_region
      // Predicated region
      $region61: #{tpu_custom_call.1} parent=59 // pred_check
        %p398 = pneg %p53
      $region62: #{tpu_custom_call.1} parent=59 // pred_check_branch
        %400 = sbr.rel (%p398) target = $region64
      $region63: #{tpu_custom_call.1} parent=59 // pred_region
        %p401 = scmp.lt.s32.totalorder %s26, 1
        %s402 = scalar_select %p401, %s26, 1
        %p403 = scmp.lt.s32.totalorder %s27, 0
        %s404 = scalar_select %p403, %s27, 0
        %s405 = sadd.s32 %s404, %s402
        %s406 = smul.addr %s405, 2
        %s407 = scalar_lea.vmem %s0, %s406
      $region64: #{tpu_custom_call.1} parent=59 // pred_fallthru
        _
      // Predicated region
      $region65: #{tpu_custom_call.1} parent=59 // pred_check
        %p408 = pneg %p81
      $region66: #{tpu_custom_call.1} parent=59 // pred_check_branch
        %410 = sbr.rel (%p408) target = $region68
      $region67: #{tpu_custom_call.1} parent=59 // pred_region
        %p411 = scmp.lt.s32.totalorder %s26, 1
        %s412 = scalar_select %p411, %s26, 1
        %p413 = scmp.lt.s32.totalorder %s27, 0
        %s414 = scalar_select %p413, %s27, 0
        %s415 = smul.addr %s412, 2
        %s416 = sadd.s32 %s414, %s415
        %s417 = smul.addr %s416, 4
        %s418 = scalar_lea.vmem %s1, %s417
      $region68: #{tpu_custom_call.1} parent=59 // pred_fallthru
        _
    $region60: #{tpu_custom_call.1} parent=5 // pred_fallthru
      _
    %p419 = scmp.le.s32.totalorder 1, %s19
    %p420 = scmp.lt.s32.totalorder %s19, 3
    %p421 = pnand %p419, %p420
    %p422 = pneg %p421
    // Predicated region
    $region69: #{tpu_custom_call.1} parent=5 // pred_check
      _
    $region70: #{tpu_custom_call.1} parent=5 // pred_check_branch
      %424 = sbr.rel (%p421) target = $region72
    $region71: #{tpu_custom_call.1} parent=5 // pred_region
      %s425 = ssub.s32 %s19, 1
      %p426 = scmp.lt.s32.totalorder %s28, 1
      %s427 = scalar_select %p426, %s28, 1
      %p428 = scmp.lt.s32.totalorder %s29, 0
      %s429 = scalar_select %p428, %s29, 0
      %s430 = sadd.s32 %s429, %s427
      %s431 = smul.addr %s430, 2
      %s432 = scalar_lea.vmem %s0, %s431
      %p433 = pneg %p59
      %p434 = pneg %p56
      %p435 = scmp.lt.s32.totalorder %s28, 1
      %s436 = scalar_select %p435, %s28, 1
      %p437 = scmp.lt.s32.totalorder %s29, 0
      %s438 = scalar_select %p437, %s29, 0
      %s439 = smul.addr %s436, 2
      %s440 = sadd.s32 %s438, %s439
      %s441 = smul.addr %s440, 4
      %s442 = scalar_lea.vmem %s1, %s441
      %p443 = pneg %p87
      %p444 = pneg %p84
      %p445 = pneg %p108
      %p446 = pneg %p105
      %p447 = pneg %p129
      %p448 = pneg %p126
      %p449 = pneg %p150
      %p450 = pneg %p147
      %p451 = pneg %p171
      %p452 = pneg %p168
      %p453 = pneg %p192
      %p454 = pneg %p189
      %p455 = pneg %p213
      %p456 = pneg %p210
      %p457 = pneg %p234
      %p458 = pneg %p231
      %p459 = pneg %p255
      %p460 = pneg %p252
      %p461 = pneg %p276
      %p462 = pneg %p273
      %p463 = pneg %p297
      %p464 = pneg %p294
      %p465 = pneg %p318
      %p466 = pneg %p315
      %p467 = pneg %p346
      %p468 = pneg %p343
      %p469 = scmp.lt.s32.totalorder %s28, 1
      %s470 = scalar_select %p469, %s28, 1
      %p471 = scmp.lt.s32.totalorder %s29, 0
      %s472 = scalar_select %p471, %s29, 0
      %s473 = sadd.s32 %s472, %s470
      %s474 = smul.addr %s473, 4
      %s475 = scalar_lea.vmem %s13, %s474
      %p476 = scmp.lt.s32.totalorder %s28, 1
      %s477 = scalar_select %p476, %s28, 1
      %p478 = scmp.lt.s32.totalorder %s29, 0
      %s479 = scalar_select %p478, %s29, 0
      %s480 = sadd.s32 %s479, %s477
      %s481 = smul.addr %s480, 2
      %s482 = scalar_lea.vmem %s0, %s481
      %p483 = scmp.lt.s32.totalorder %s28, 1
      %s484 = scalar_select %p483, %s28, 1
      %p485 = scmp.lt.s32.totalorder %s29, 0
      %s486 = scalar_select %p485, %s29, 0
      %s487 = smul.addr %s484, 2
      %s488 = sadd.s32 %s486, %s487
      %s489 = smul.addr %s488, 4
      %s490 = scalar_lea.vmem %s1, %s489
      %p491 = scmp.lt.s32.totalorder %s28, 1
      %s492 = scalar_select %p491, %s28, 1
      %p493 = scmp.lt.s32.totalorder %s29, 0
      %s494 = scalar_select %p493, %s29, 0
      %s495 = sadd.s32 %s494, %s492
      %s496 = smul.addr %s495, 4
      %s497 = scalar_lea.vmem %s13, %s496
      %v499 = vld [vmem:[%s482] sm:$0x3]
      %v500 = vld [vmem:[%s490] sm:$0xf]
      %v501 = vld [vmem:[%s490 + $0x4] sm:$0x3]
      %v502 = vld [vmem:[%s2] sm:$0xf]
      %v503 = vld [vmem:[%s3] sm:$0xff]
      %505 = vset.pattern.permute.xlu0 0
      %506 = vperm.xlu0 %505, %v503
      %v507 = vpop.permute.xlu0 %506
      %vm509 = vcmask 23552
      %v511 = vsel %vm509, %v502, 0
      %vm513 = vcmask 1040384
      %vm514 = vcmask 1041408
      %v515 = vsel %vm513, 4294967295, 65535
      %v516 = vsel %vm514, %v515, 0
      %v518 = vand.u32 %v499, %v516
      %520 = vmatprep.subr.bf16.mxu0 0
      %521 = vmatpush1.bf16.msra.mxu0 %v518
      %522 = vmatprep.subr.bf16.mxu0 0
      %523 = vmatpush1.bf16.msra.mxu0 0
      %524 = vmatprep.subr.bf16.mxu0 0
      %525 = vmatpush1.bf16.msra.mxu0 0
      %526 = vmatprep.subr.bf16.mxu0 0
      %527 = vmatpush1.bf16.msra.mxu0 0
      %528 = vmatprep.subr.bf16.mxu0 0
      %529 = vmatpush1.bf16.msra.mxu0 0
      %530 = vmatprep.subr.bf16.mxu0 0
      %531 = vmatpush1.bf16.msra.mxu0 0
      %532 = vmatprep.subr.bf16.mxu0 0
      %533 = vmatpush1.bf16.msra.mxu0 0
      %534 = vmatprep.subr.bf16.mxu0 0
      %535 = vmatpush1.bf16.msra.mxu0 0
      %536 = vmatprep.subr.bf16.mxu0 0
      %537 = vmatpush1.bf16.msra.mxu0 0
      %538 = vmatprep.subr.bf16.mxu0 0
      %539 = vmatpush1.bf16.msra.mxu0 0
      %540 = vmatprep.subr.bf16.mxu0 0
      %541 = vmatpush1.bf16.msra.mxu0 0
      %542 = vmatprep.subr.bf16.mxu0 0
      %543 = vmatpush1.bf16.msra.mxu0 0
      %544 = vmatprep.subr.bf16.mxu0 0
      %545 = vmatpush1.bf16.msra.mxu0 0
      %546 = vmatprep.subr.bf16.mxu0 0
      %547 = vmatpush1.bf16.msra.mxu0 0
      %548 = vmatprep.subr.bf16.mxu0 0
      %549 = vmatpush1.bf16.msra.mxu0 0
      %550 = vmatprep.subr.bf16.mxu0 0
      %551 = vmatpush1.bf16.msra.mxu0 0
      %552 = vmatprep.mubr.bf16.mxu0 0
      %553 = vmatmul.mubr.bf16.gmra.mrb[0].mxu0 %v511
      %v554 = vpop.f32.mrb[0].mxu0
      %v555 = vadd.f32 %v507, %v554
      %v556 = vpop.f32.mrb[0].mxu0
      %v557 = vpop.f32.mrb[0].mxu0
      %v558 = vpop.f32.mrb[0].mxu0
      %559 = vdwg.mxu0
      %v560 = vmax.f32 %v555, 0.0
      %v561 = vld [vmem:[%s4] sm:$0xf]
      %v562 = vld [vmem:[%s4 + $0x4] sm:$0xf]
      %v563 = vld [vmem:[%s4 + $0x8] sm:$0xf]
      %v564 = vpack.c.bf16 %v560, %v560
      %v565 = vld [vmem:[%s5] sm:$0xff]
      %v566 = vld [vmem:[%s5 + $0x8] sm:$0xff]
      %v567 = vld [vmem:[%s5 + $0x10] sm:$0xff]
      %569 = vset.pattern.permute.xlu0 0
      %570 = vperm.xlu0 %569, %v565
      %v571 = vpop.permute.xlu0 %570
      %574 = vset.pattern.permute.xlu0 0
      %575 = vperm.xlu0 %574, %v566
      %v576 = vpop.permute.xlu0 %575
      %579 = vset.pattern.permute.xlu0 0
      %580 = vperm.xlu0 %579, %v567
      %v581 = vpop.permute.xlu0 %580
      %v586 = vunpack.c.l.b16 %v561
      %v587 = vunpack.c.l.b16 %v562
      %v588 = vunpack.c.l.b16 %v563
      %v589 = vpack.c.b16 %v587, %v586
      %v590 = vpack.c.b16 %v588, %v588
      %vm591 = vcmask 64512
      %v593 = vsel %vm591, %v589, 0
      %v596 = vsel %vm591, %v590, 0
      %vm598 = vcmask 1043456
      %v600 = vsel %vm598, %v564, 0
      %602 = vmatprep.subr.bf16.mxu0 0
      %603 = vmatpush1.bf16.msra.mxu0 %v600
      %604 = vmatprep.subr.bf16.mxu0 0
      %605 = vmatpush1.bf16.msra.mxu0 0
      %606 = vmatprep.subr.bf16.mxu0 0
      %607 = vmatpush1.bf16.msra.mxu0 0
      %608 = vmatprep.subr.bf16.mxu0 0
      %609 = vmatpush1.bf16.msra.mxu0 0
      %610 = vmatprep.subr.bf16.mxu0 0
      %611 = vmatpush1.bf16.msra.mxu0 0
      %612 = vmatprep.subr.bf16.mxu0 0
      %613 = vmatpush1.bf16.msra.mxu0 0
      %614 = vmatprep.subr.bf16.mxu0 0
      %615 = vmatpush1.bf16.msra.mxu0 0
      %616 = vmatprep.subr.bf16.mxu0 0
      %617 = vmatpush1.bf16.msra.mxu0 0
      %618 = vmatprep.subr.bf16.mxu0 0
      %619 = vmatpush1.bf16.msra.mxu0 0
      %620 = vmatprep.subr.bf16.mxu0 0
      %621 = vmatpush1.bf16.msra.mxu0 0
      %622 = vmatprep.subr.bf16.mxu0 0
      %623 = vmatpush1.bf16.msra.mxu0 0
      %624 = vmatprep.subr.bf16.mxu0 0
      %625 = vmatpush1.bf16.msra.mxu0 0
      %626 = vmatprep.subr.bf16.mxu0 0
      %627 = vmatpush1.bf16.msra.mxu0 0
      %628 = vmatprep.subr.bf16.mxu0 0
      %629 = vmatpush1.bf16.msra.mxu0 0
      %630 = vmatprep.subr.bf16.mxu0 0
      %631 = vmatpush1.bf16.msra.mxu0 0
      %632 = vmatprep.subr.bf16.mxu0 0
      %633 = vmatpush1.bf16.msra.mxu0 0
      %634 = vmatprep.mubr.bf16.mxu0 0
      %635 = vmatmul.mubr.bf16.gmra.mrb[0].mxu0 %v593
      %v636 = vpop.f32.mrb[0].mxu0
      %v637 = vadd.f32 %v571, %v636
      %v638 = vpop.f32.mrb[0].mxu0
      %v639 = vpop.f32.mrb[0].mxu0
      %v640 = vadd.f32 %v576, %v639
      %v641 = vpop.f32.mrb[0].mxu0
      %642 = vmatprep.mubr.bf16.mxu0 0
      %643 = vmatmul.mubr.bf16.gmra.mrb[0].mxu0 %v596
      %v644 = vpop.f32.mrb[0].mxu0
      %v645 = vadd.f32 %v581, %v644
      %v646 = vpop.f32.mrb[0].mxu0
      %v647 = vpop.f32.mrb[0].mxu0
      %v648 = vpop.f32.mrb[0].mxu0
      %649 = vdwg.mxu0
      %v650 = vmax.f32 %v637, 0.0
      %v651 = vmax.f32 %v640, 0.0
      %v652 = vmax.f32 %v645, 0.0
      %vm653 = vcmp.ne.f32.partialorder %v637, %v637
      %vm654 = vcmp.ne.f32.partialorder %v640, %v640
      %vm655 = vcmp.ne.f32.partialorder %v645, %v645
      %v656 = vadd.f32 %v637, 0.0
      %v657 = vadd.f32 %v640, 0.0
      %v658 = vadd.f32 %v645, 0.0
      %v659 = vand.u32 2147483647, %v637
      %v660 = vand.u32 2147483647, %v640
      %v661 = vand.u32 2147483647, %v645
      %v662 = vsub.f32 0.0, %v659
      %v663 = vsub.f32 0.0, %v660
      %v664 = vsub.f32 0.0, %v661
      %v665 = vmul.f32 %v662, 1.442695
      %v666 = vpow.pop %v665
      %v667 = vmul.f32 %v663, 1.442695
      %v668 = vpow.pop %v667
      %v669 = vmul.f32 %v664, 1.442695
      %v670 = vpow.pop %v669
      %v671 = vadd.f32 %v666, 1.0
      %v672 = vlog2.pop %v671
      %v673 = vmul.f32 %v672, 0.6931472
      %v674 = vmul.f32 -0.5, %v666
      %v675 = vadd.f32 %v674, 1.0
      %v676 = vmul.f32 %v675, %v666
      %v677 = vand.u32 2147483647, %v666
      %vm678 = vcmp.lt.f32.partialorder %v677, 0.0004427343
      %v679 = vsel %vm678, %v676, %v673
      %v680 = vadd.f32 %v668, 1.0
      %v681 = vlog2.pop %v680
      %v682 = vmul.f32 %v681, 0.6931472
      %v683 = vmul.f32 -0.5, %v668
      %v684 = vadd.f32 %v683, 1.0
      %v685 = vmul.f32 %v684, %v668
      %v686 = vand.u32 2147483647, %v668
      %vm687 = vcmp.lt.f32.partialorder %v686, 0.0004427343
      %v688 = vsel %vm687, %v685, %v682
      %v689 = vadd.f32 %v670, 1.0
      %v690 = vlog2.pop %v689
      %v691 = vmul.f32 %v690, 0.6931472
      %v692 = vmul.f32 -0.5, %v670
      %v693 = vadd.f32 %v692, 1.0
      %v694 = vmul.f32 %v693, %v670
      %v695 = vand.u32 2147483647, %v670
      %vm696 = vcmp.lt.f32.partialorder %v695, 0.0004427343
      %v697 = vsel %vm696, %v694, %v691
      %v698 = vadd.f32 %v650, %v679
      %v699 = vadd.f32 %v651, %v688
      %v700 = vadd.f32 %v652, %v697
      %v701 = vsel %vm653, %v656, %v698
      %v702 = vsel %vm654, %v657, %v699
      %v703 = vsel %vm655, %v658, %v700
      %v704 = vld [vmem:[%s6] sm:$0x3]
      %v705 = vpack.c.bf16 %v702, %v701
      %v706 = vpack.c.bf16 %v703, %v703
      %v707 = vld [vmem:[%s7] sm:$0x7]
      %709 = vset.pattern.permute.xlu0 0
      %710 = vperm.xlu0 %709, %v707
      %v711 = vpop.permute.xlu0 %710
      %vm713 = vcmask 195584
      %v715 = vsel %vm713, %v704, 0
      %v718 = vsel %vm598, %v706, 0
      %720 = vmatprep.subr.bf16.mxu0 0
      %721 = vmatpush1.bf16.msra.mxu0 %v705
      %722 = vmatprep.subr.bf16.mxu0 0
      %723 = vmatpush1.bf16.msra.mxu0 %v718
      %724 = vmatprep.subr.bf16.mxu0 0
      %725 = vmatpush1.bf16.msra.mxu0 0
      %726 = vmatprep.subr.bf16.mxu0 0
      %727 = vmatpush1.bf16.msra.mxu0 0
      %728 = vmatprep.subr.bf16.mxu0 0
      %729 = vmatpush1.bf16.msra.mxu0 0
      %730 = vmatprep.subr.bf16.mxu0 0
      %731 = vmatpush1.bf16.msra.mxu0 0
      %732 = vmatprep.subr.bf16.mxu0 0
      %733 = vmatpush1.bf16.msra.mxu0 0
      %734 = vmatprep.subr.bf16.mxu0 0
      %735 = vmatpush1.bf16.msra.mxu0 0
      %736 = vmatprep.subr.bf16.mxu0 0
      %737 = vmatpush1.bf16.msra.mxu0 0
      %738 = vmatprep.subr.bf16.mxu0 0
      %739 = vmatpush1.bf16.msra.mxu0 0
      %740 = vmatprep.subr.bf16.mxu0 0
      %741 = vmatpush1.bf16.msra.mxu0 0
      %742 = vmatprep.subr.bf16.mxu0 0
      %743 = vmatpush1.bf16.msra.mxu0 0
      %744 = vmatprep.subr.bf16.mxu0 0
      %745 = vmatpush1.bf16.msra.mxu0 0
      %746 = vmatprep.subr.bf16.mxu0 0
      %747 = vmatpush1.bf16.msra.mxu0 0
      %748 = vmatprep.subr.bf16.mxu0 0
      %749 = vmatpush1.bf16.msra.mxu0 0
      %750 = vmatprep.subr.bf16.mxu0 0
      %751 = vmatpush1.bf16.msra.mxu0 0
      %752 = vmatprep.mubr.bf16.mxu0 0
      %753 = vmatmul.mubr.bf16.gmra.mrb[0].mxu0 %v715
      %v754 = vpop.f32.mrb[0].mxu0
      %v755 = vadd.f32 %v711, %v754
      %v756 = vpop.f32.mrb[0].mxu0
      %v757 = vpop.f32.mrb[0].mxu0
      %v758 = vpop.f32.mrb[0].mxu0
      %759 = vdwg.mxu0
      %v760 = vmax.f32 %v755, 0.0
      %vm761 = vcmp.ne.f32.partialorder %v755, %v755
      %v762 = vadd.f32 %v755, 0.0
      %v763 = vand.u32 2147483647, %v755
      %v764 = vsub.f32 0.0, %v763
      %v765 = vmul.f32 %v764, 1.442695
      %v766 = vpow.pop %v765
      %v767 = vadd.f32 %v766, 1.0
      %v768 = vlog2.pop %v767
      %v769 = vmul.f32 %v768, 0.6931472
      %v770 = vmul.f32 -0.5, %v766
      %v771 = vadd.f32 %v770, 1.0
      %v772 = vmul.f32 %v771, %v766
      %v773 = vand.u32 2147483647, %v766
      %vm774 = vcmp.lt.f32.partialorder %v773, 0.0004427343
      %v775 = vsel %vm774, %v772, %v769
      %v776 = vadd.f32 %v760, %v775
      %v777 = vsel %vm761, %v762, %v776
      %v778 = vld [vmem:[%s8] sm:$0xf]
      %v779 = vld [vmem:[%s8 + $0x4] sm:$0xf]
      %v780 = vld [vmem:[%s8 + $0x8] sm:$0xf]
      %v781 = vld [vmem:[%s9] sm:$0xff]
      %v782 = vld [vmem:[%s9 + $0x8] sm:$0xff]
      %v783 = vld [vmem:[%s9 + $0x10] sm:$0xff]
      %785 = vset.pattern.permute.xlu0 0
      %786 = vperm.xlu0 %785, %v781
      %v787 = vpop.permute.xlu0 %786
      %790 = vset.pattern.permute.xlu0 0
      %791 = vperm.xlu0 %790, %v782
      %v792 = vpop.permute.xlu0 %791
      %795 = vset.pattern.permute.xlu0 0
      %796 = vperm.xlu0 %795, %v783
      %v797 = vpop.permute.xlu0 %796
      %v802 = vunpack.c.l.b16 %v778
      %v803 = vunpack.c.l.b16 %v779
      %v804 = vunpack.c.l.b16 %v780
      %v805 = vpack.c.b16 %v803, %v802
      %v806 = vpack.c.b16 %v804, %v804
      %v809 = vunpack.c.l.b16 %v500
      %v810 = vunpack.c.l.b16 %v501
      %v811 = vpack.c.b16 %v810, %v809
      %vm812 = vcmask 97280
      %v814 = vsel %vm812, %v805, 0
      %v817 = vsel %vm812, %v806, 0
      %vm819 = vcmask 1045504
      %v821 = vsel %vm819, %v811, 0
      %823 = vmatprep.subr.bf16.mxu0 0
      %824 = vmatpush1.bf16.msra.mxu0 %v821
      %825 = vmatprep.subr.bf16.mxu0 0
      %826 = vmatpush1.bf16.msra.mxu0 0
      %827 = vmatprep.subr.bf16.mxu0 0
      %828 = vmatpush1.bf16.msra.mxu0 0
      %829 = vmatprep.subr.bf16.mxu0 0
      %830 = vmatpush1.bf16.msra.mxu0 0
      %831 = vmatprep.subr.bf16.mxu0 0
      %832 = vmatpush1.bf16.msra.mxu0 0
      %833 = vmatprep.subr.bf16.mxu0 0
      %834 = vmatpush1.bf16.msra.mxu0 0
      %835 = vmatprep.subr.bf16.mxu0 0
      %836 = vmatpush1.bf16.msra.mxu0 0
      %837 = vmatprep.subr.bf16.mxu0 0
      %838 = vmatpush1.bf16.msra.mxu0 0
      %839 = vmatprep.subr.bf16.mxu0 0
      %840 = vmatpush1.bf16.msra.mxu0 0
      %841 = vmatprep.subr.bf16.mxu0 0
      %842 = vmatpush1.bf16.msra.mxu0 0
      %843 = vmatprep.subr.bf16.mxu0 0
      %844 = vmatpush1.bf16.msra.mxu0 0
      %845 = vmatprep.subr.bf16.mxu0 0
      %846 = vmatpush1.bf16.msra.mxu0 0
      %847 = vmatprep.subr.bf16.mxu0 0
      %848 = vmatpush1.bf16.msra.mxu0 0
      %849 = vmatprep.subr.bf16.mxu0 0
      %850 = vmatpush1.bf16.msra.mxu0 0
      %851 = vmatprep.subr.bf16.mxu0 0
      %852 = vmatpush1.bf16.msra.mxu0 0
      %853 = vmatprep.subr.bf16.mxu0 0
      %854 = vmatpush1.bf16.msra.mxu0 0
      %855 = vmatprep.mubr.bf16.mxu0 0
      %856 = vmatmul.mubr.bf16.gmra.mrb[0].mxu0 %v814
      %v857 = vpop.f32.mrb[0].mxu0
      %v858 = vadd.f32 %v787, %v857
      %v859 = vpop.f32.mrb[0].mxu0
      %v860 = vpop.f32.mrb[0].mxu0
      %v861 = vadd.f32 %v792, %v860
      %v862 = vpop.f32.mrb[0].mxu0
      %863 = vmatprep.mubr.bf16.mxu0 0
      %864 = vmatmul.mubr.bf16.gmra.mrb[0].mxu0 %v817
      %v865 = vpop.f32.mrb[0].mxu0
      %v866 = vadd.f32 %v797, %v865
      %v867 = vpop.f32.mrb[0].mxu0
      %v868 = vpop.f32.mrb[0].mxu0
      %v869 = vpop.f32.mrb[0].mxu0
      %870 = vdwg.mxu0
      %v871 = vmax.f32 %v858, 0.0
      %v872 = vmax.f32 %v861, 0.0
      %v873 = vmax.f32 %v866, 0.0
      %vm874 = vcmp.ne.f32.partialorder %v858, %v858
      %vm875 = vcmp.ne.f32.partialorder %v861, %v861
      %vm876 = vcmp.ne.f32.partialorder %v866, %v866
      %v877 = vadd.f32 %v858, 0.0
      %v878 = vadd.f32 %v861, 0.0
      %v879 = vadd.f32 %v866, 0.0
      %v880 = vand.u32 2147483647, %v858
      %v881 = vand.u32 2147483647, %v861
      %v882 = vand.u32 2147483647, %v866
      %v883 = vsub.f32 0.0, %v880
      %v884 = vsub.f32 0.0, %v881
      %v885 = vsub.f32 0.0, %v882
      %v886 = vmul.f32 %v883, 1.442695
      %v887 = vpow.pop %v886
      %v888 = vmul.f32 %v884, 1.442695
      %v889 = vpow.pop %v888
      %v890 = vmul.f32 %v885, 1.442695
      %v891 = vpow.pop %v890
      %v892 = vadd.f32 %v887, 1.0
      %v893 = vlog2.pop %v892
      %v894 = vmul.f32 %v893, 0.6931472
      %v895 = vmul.f32 -0.5, %v887
      %v896 = vadd.f32 %v895, 1.0
      %v897 = vmul.f32 %v896, %v887
      %v898 = vand.u32 2147483647, %v887
      %vm899 = vcmp.lt.f32.partialorder %v898, 0.0004427343
      %v900 = vsel %vm899, %v897, %v894
      %v901 = vadd.f32 %v889, 1.0
      %v902 = vlog2.pop %v901
      %v903 = vmul.f32 %v902, 0.6931472
      %v904 = vmul.f32 -0.5, %v889
      %v905 = vadd.f32 %v904, 1.0
      %v906 = vmul.f32 %v905, %v889
      %v907 = vand.u32 2147483647, %v889
      %vm908 = vcmp.lt.f32.partialorder %v907, 0.0004427343
      %v909 = vsel %vm908, %v906, %v903
      %v910 = vadd.f32 %v891, 1.0
      %v911 = vlog2.pop %v910
      %v912 = vmul.f32 %v911, 0.6931472
      %v913 = vmul.f32 -0.5, %v891
      %v914 = vadd.f32 %v913, 1.0
      %v915 = vmul.f32 %v914, %v891
      %v916 = vand.u32 2147483647, %v891
      %vm917 = vcmp.lt.f32.partialorder %v916, 0.0004427343
      %v918 = vsel %vm917, %v915, %v912
      %v919 = vadd.f32 %v871, %v900
      %v920 = vadd.f32 %v872, %v909
      %v921 = vadd.f32 %v873, %v918
      %v922 = vsel %vm874, %v877, %v919
      %v923 = vsel %vm875, %v878, %v920
      %v924 = vsel %vm876, %v879, %v921
      %v925 = vld [vmem:[%s10] sm:$0x7]
      %927 = vset.pattern.permute.xlu0 0
      %928 = vperm.xlu0 %927, %v925
      %v929 = vpop.permute.xlu0 %928
      %v931 = vmul.f32 %v777, %v929
      %v932 = vld [vmem:[%s11] sm:$0x3]
      %v933 = vpack.c.bf16 %v923, %v922
      %v934 = vpack.c.bf16 %v924, %v924
      %v936 = vsel %vm713, %v932, 0
      %v939 = vsel %vm598, %v934, 0
      %941 = vmatprep.subr.bf16.mxu0 0
      %942 = vmatpush1.bf16.msra.mxu0 %v933
      %943 = vmatprep.subr.bf16.mxu0 0
      %944 = vmatpush1.bf16.msra.mxu0 %v939
      %945 = vmatprep.subr.bf16.mxu0 0
      %946 = vmatpush1.bf16.msra.mxu0 0
      %947 = vmatprep.subr.bf16.mxu0 0
      %948 = vmatpush1.bf16.msra.mxu0 0
      %949 = vmatprep.subr.bf16.mxu0 0
      %950 = vmatpush1.bf16.msra.mxu0 0
      %951 = vmatprep.subr.bf16.mxu0 0
      %952 = vmatpush1.bf16.msra.mxu0 0
      %953 = vmatprep.subr.bf16.mxu0 0
      %954 = vmatpush1.bf16.msra.mxu0 0
      %955 = vmatprep.subr.bf16.mxu0 0
      %956 = vmatpush1.bf16.msra.mxu0 0
      %957 = vmatprep.subr.bf16.mxu0 0
      %958 = vmatpush1.bf16.msra.mxu0 0
      %959 = vmatprep.subr.bf16.mxu0 0
      %960 = vmatpush1.bf16.msra.mxu0 0
      %961 = vmatprep.subr.bf16.mxu0 0
      %962 = vmatpush1.bf16.msra.mxu0 0
      %963 = vmatprep.subr.bf16.mxu0 0
      %964 = vmatpush1.bf16.msra.mxu0 0
      %965 = vmatprep.subr.bf16.mxu0 0
      %966 = vmatpush1.bf16.msra.mxu0 0
      %967 = vmatprep.subr.bf16.mxu0 0
      %968 = vmatpush1.bf16.msra.mxu0 0
      %969 = vmatprep.subr.bf16.mxu0 0
      %970 = vmatpush1.bf16.msra.mxu0 0
      %971 = vmatprep.subr.bf16.mxu0 0
      %972 = vmatpush1.bf16.msra.mxu0 0
      %973 = vmatprep.mubr.bf16.mxu0 0
      %974 = vmatmul.mubr.bf16.gmra.mrb[0].mxu0 %v936
      %v975 = vpop.f32.mrb[0].mxu0
      %v976 = vadd.f32 0.0, %v975
      %v977 = vpop.f32.mrb[0].mxu0
      %v978 = vpop.f32.mrb[0].mxu0
      %v979 = vpop.f32.mrb[0].mxu0
      %980 = vdwg.mxu0
      %v981 = vadd.f32 %v931, %v976
      %v982 = vld [vmem:[%s12] sm:$0x7]
      %984 = vset.pattern.permute.xlu0 0
      %985 = vperm.xlu0 %984, %v982
      %v986 = vpop.permute.xlu0 %985
      %v988 = vadd.f32 %v981, %v986
      %989 = vst [vmem:[%s497] sm:$0x7] %v988
      %p990 = scmp.lt.s32.totalorder %s28, 1
      %s991 = scalar_select %p990, %s28, 1
      %p992 = scmp.lt.s32.totalorder %s29, 0
      %s993 = scalar_select %p992, %s29, 0
      %s994 = sadd.s32 %s993, %s991
      %s995 = smul.addr %s994, 4
      %s996 = scalar_lea.vmem %s13, %s995
      // Predicated region
      $region73: #{tpu_custom_call.1} parent=71 // pred_check
        %p997 = pneg %p343
      $region74: #{tpu_custom_call.1} parent=71 // pred_check_branch
        %999 = sbr.rel (%p997) target = $region76
      $region75: #{tpu_custom_call.1} parent=71 // pred_region
        _
      $region76: #{tpu_custom_call.1} parent=71 // pred_fallthru
        _
    $region72: #{tpu_custom_call.1} parent=5 // pred_fallthru
      _
    %p1000 = scmp.le.s32.totalorder 2, %s19
    // Predicated region
    $region77: #{tpu_custom_call.1} parent=5 // pred_check
      %p1001 = pneg %p1000
    $region78: #{tpu_custom_call.1} parent=5 // pred_check_branch
      %1003 = sbr.rel (%p1001) target = $region80
    $region79: #{tpu_custom_call.1} parent=5 // pred_region
      %s1004 = ssub.s32 %s19, 2
      // Predicated region
      $region81: #{tpu_custom_call.1} parent=79 // pred_check
        %p1005 = pneg %p349
      $region82: #{tpu_custom_call.1} parent=79 // pred_check_branch
        %1007 = sbr.rel (%p1005) target = $region84
      $region83: #{tpu_custom_call.1} parent=79 // pred_region
        %p1008 = scmp.lt.s32.totalorder %s30, 1
        %s1009 = scalar_select %p1008, %s30, 1
        %p1010 = scmp.lt.s32.totalorder %s31, 0
        %s1011 = scalar_select %p1010, %s31, 0
        %s1012 = sadd.s32 %s1011, %s1009
        %s1013 = smul.addr %s1012, 4
        %s1014 = scalar_lea.vmem %s13, %s1013
      $region84: #{tpu_custom_call.1} parent=79 // pred_fallthru
        _
    $region80: #{tpu_custom_call.1} parent=5 // pred_fallthru
      _
  $region6: #{tpu_custom_call.1} parent=0 // loop_footer
    %s23 = sadd.s32 1, %s19
  $region7: #{tpu_custom_call.1} parent=0 // loop_footer_branch
    %18 = sbr.rel target = $region3
  $region8: #{tpu_custom_call.1} parent=0 // loop_exit
    _

</llo_original>
